<compile_context>
chip_gen: v6e
topology: v6e:2x2x1
jax: 0.10.0
libtpu: 0.0.40
codegen_flags: <defaults>
</compile_context>

<pallas_src>
import math

import jax
import jax.numpy as jnp
from jax.experimental import pallas as pl
from jax.experimental.pallas import tpu as pltpu

_INV_SQRT2 = 1.0 / math.sqrt(2.0)


# ---------------------------------------------------------------------------
# Kernel bodies
# ---------------------------------------------------------------------------
def _fc2_partial(x_ref, w1_ref, b1_ref, w2_ref):
    """fc2 partial-sum (f32) for one ff stripe, with bias + exact GELU."""
    # fc1: native-dtype MXU operands, f32 accumulation.
    h = jnp.dot(x_ref[...], w1_ref[...], preferred_element_type=jnp.float32)
    h = h + b1_ref[...].astype(jnp.float32)
    # Exact (erf-based) GELU, matching F.gelu's default.
    g = 0.5 * h * (1.0 + jax.lax.erf(h * _INV_SQRT2))
    # Dropout -> identity (eval mode).
    # fc2 partial: cast intermediate back to the weight dtype (native MXU rate).
    return jnp.dot(g.astype(w2_ref.dtype), w2_ref[...],
                   preferred_element_type=jnp.float32)


def _mlp_kernel_f32out(x_ref, w1_ref, b1_ref, w2_ref, b2_ref, o_ref):
    """f32 output: accumulate directly into o_ref (no scratch buffer)."""
    k = pl.program_id(1)
    part = _fc2_partial(x_ref, w1_ref, b1_ref, w2_ref)

    @pl.when(k == 0)
    def _():  # direct write on the first stripe; b2 folded in here
        o_ref[...] = part + b2_ref[...].astype(jnp.float32)

    @pl.when(k != 0)
    def _():
        o_ref[...] += part


def _mlp_kernel_accout(x_ref, w1_ref, b1_ref, w2_ref, b2_ref, o_ref, acc_ref):
    """Non-f32 output: f32 VMEM accumulator, single cast on the last stripe."""
    k = pl.program_id(1)
    part = _fc2_partial(x_ref, w1_ref, b1_ref, w2_ref)

    @pl.when(k == 0)
    def _():
        acc_ref[...] = part + b2_ref[...].astype(jnp.float32)

    @pl.when(k != 0)
    def _():
        acc_ref[...] += part

    @pl.when(k == pl.num_programs(1) - 1)
    def _():
        o_ref[...] = acc_ref[...].astype(o_ref.dtype)


# ---------------------------------------------------------------------------
# Tiling / VMEM policy
# ---------------------------------------------------------------------------
def _round_up(x, m):
    return -(-x // m) * m


def _vmem_cap_bytes():
    phys = 64 * 1024 * 1024  # conservative fallback, valid on every generation
    try:
        phys = int(pltpu.get_tpu_info().vmem_capacity_bytes)
    except Exception:
        pass
    # Leave ~18% headroom for Mosaic internal scratch / semaphores.
    return int(phys * 0.82)


def _vmem_need(tm, tf, hidden, in_sz, out_sz, acc_separate):
    """Honest per-buffer VMEM estimate for one (tm, tf) tiling."""
    need = 2 * tm * hidden * in_sz           # x tile (double-buffered)
    need += 2 * hidden * tf * in_sz          # w1 stripe (double-buffered)
    need += 2 * 8 * tf * in_sz               # b1 stripe (sublane-padded)
    need += 2 * tf * hidden * in_sz          # w2 stripe (double-buffered)
    need += 2 * 8 * hidden * in_sz           # b2
    need += 1 * tm * hidden * out_sz         # output tile (single-buffered)
    if acc_separate:
        need += tm * hidden * 4              # f32 accumulator scratch
    need += tm * tf * 4                      # fc1/GELU f32 intermediate
    need += 2 * 1024 * 1024                  # compiler-internal scratch headroom
    return need


def _pick_tf(ff):
    """Return (tf, ff_pad): ff stripe width and the (possibly padded) ff."""
    if ff <= 512:
        return ff, ff                        # single full stripe
    for cand in (512, 256, 128):             # note: >=, so ff==512 keeps 512
        if ff % cand == 0:
            return cand, ff
    # Large ff not a multiple of 128: zero-pad to a 512 multiple.  Padded
    # columns of w1 / rows of w2 contribute exactly 0 (GELU(0) = 0).
    return 512, _round_up(ff, 512)


def _select_tiles(M, hidden, ff, in_dtype, out_dtype):
    in_sz = jnp.dtype(in_dtype).itemsize
    out_sz = jnp.dtype(out_dtype).itemsize
    acc_separate = jnp.dtype(out_dtype) != jnp.dtype(jnp.float32)
    cap = _vmem_cap_bytes()

    tf0, ff_pad = _pick_tf(ff)
    tf_cands = [tf0] + [c for c in (256, 128) if c < tf0 and ff_pad % c == 0]

    M8 = _round_up(max(M, 1), 8)
    tm_cands = {c for c in (1024, 768, 512, 384, 256, 128, 64, 32, 16, 8)
                if c <= M8}
    # Near-even 8-multiple splits of M (ragged M): minimal padding while
    # keeping >= 2 M tiles for the v7x megacore "parallel" axis.
    for n in (2, 3, 4, 6, 8):
        c = _round_up(-(-M8 // n), 8)
        if 8 <= c <= 1024:
            tm_cands.add(c)
    tm_cands.add(min(M8, 1024))
    want_two = M8 >= 16

    best = None
    for tf in tf_cands:
        for tm in tm_cands:
            m_pad = _round_up(M8, tm)
            n_tiles = m_pad // tm
            need = _vmem_need(tm, tf, hidden, in_sz, out_sz, acc_separate)
            fits = need <= cap
            meets_two = (n_tiles >= 2) or (not want_two)
            # Cost proxy: weights are re-streamed once per M tile; padded rows
            # burn fc1+fc2 work proportional to (m_pad - M).
            cost = (n_tiles * 2 * hidden * ff_pad * in_sz
                    + (m_pad - M) * 2 * ff_pad * in_sz)
            key = (fits, meets_two, -cost, tf, tm)
            if best is None or key > best[0]:
                best = (key, tm, tf, m_pad, need)

    _, tm, tf, m_pad, need = best
    vmem_limit = int(min(max(int(need * 1.25), 16 * 1024 * 1024), cap))
    return tm, tf, ff_pad, m_pad, vmem_limit, acc_separate


# ---------------------------------------------------------------------------
# Wrapper
# ---------------------------------------------------------------------------
def transformer_mlp(x, w1, b1, w2, b2):
    """x: (batch, seq, hidden). w1: (hidden, ff), b1: (ff,), w2: (ff, hidden), b2: (hidden,)."""
    batch, seq, hidden = x.shape
    ff = w1.shape[1]
    M = batch * seq
    out_dtype = x.dtype

    tm, tf, ff_pad, M_pad, vmem_limit, acc_separate = _select_tiles(
        M, hidden, ff, x.dtype, out_dtype)

    x2 = x.reshape(M, hidden)
    if M_pad != M:
        x2 = jnp.pad(x2, ((0, M_pad - M), (0, 0)))
    if ff_pad != ff:
        w1 = jnp.pad(w1, ((0, 0), (0, ff_pad - ff)))
        b1 = jnp.pad(b1, (0, ff_pad - ff))
        w2 = jnp.pad(w2, ((0, ff_pad - ff), (0, 0)))

    b1_2d = b1.reshape(1, ff_pad)
    b2_2d = b2.reshape(1, hidden)

    grid = (M_pad // tm, ff_pad // tf)

    # Output is written back only once per M tile -> single-buffer it.
    out_block, out_index = (tm, hidden), (lambda i, k: (i, 0))
    try:
        out_spec = pl.BlockSpec(out_block, out_index,
                                pipeline_mode=pl.Buffered(1))
    except TypeError:  # pipeline_mode unsupported in this jax version
        out_spec = pl.BlockSpec(out_block, out_index)

    if acc_separate:
        kernel = _mlp_kernel_accout
        scratch = [pltpu.VMEM((tm, hidden), jnp.float32)]
    else:
        kernel = _mlp_kernel_f32out   # accumulate directly in o_ref
        scratch = []

    out2 = pl.pallas_call(
        kernel,
        out_shape=jax.ShapeDtypeStruct((M_pad, hidden), out_dtype),
        grid_spec=pltpu.PrefetchScalarGridSpec(
            num_scalar_prefetch=0,
            grid=grid,
            in_specs=[
                pl.BlockSpec((tm, hidden), lambda i, k: (i, 0)),   # x tile
                pl.BlockSpec((hidden, tf), lambda i, k: (0, k)),   # w1 stripe
                pl.BlockSpec((1, tf), lambda i, k: (0, k)),        # b1 stripe
                pl.BlockSpec((tf, hidden), lambda i, k: (k, 0)),   # w2 stripe
                pl.BlockSpec((1, hidden), lambda i, k: (0, 0)),    # b2
            ],
            out_specs=out_spec,
            scratch_shapes=scratch,
        ),
        compiler_params=pltpu.CompilerParams(
            dimension_semantics=("parallel", "arbitrary"),
            vmem_limit_bytes=vmem_limit,
        ),
    )(x2, w1, b1_2d, w2, b2_2d)

    if M_pad != M:
        out2 = out2[:M]
    return out2.reshape(batch, seq, hidden)


# ---------------------------------------------------------------------------
# Reference + test harness
# ---------------------------------------------------------------------------
def _reference(x, w1, b1, w2, b2):
    xf, w1f, b1f = x.astype(jnp.float32), w1.astype(jnp.float32), b1.astype(jnp.float32)
    w2f, b2f = w2.astype(jnp.float32), b2.astype(jnp.float32)
    h = jnp.einsum("bsh,hf->bsf", xf, w1f) + b1f
    g = 0.5 * h * (1.0 + jax.lax.erf(h * _INV_SQRT2))
    return jnp.einsum("bsf,fh->bsh", g, w2f) + b2f


if __name__ == "__main__":
    # Small shapes: batch=2, seq=8, hidden=32, ff=64
    batch, seq, hidden, ff = 2, 8, 32, 64

    key = jax.random.PRNGKey(0)
    kx, kw1, kb1, kw2, kb2 = jax.random.split(key, 5)

    x = jax.random.normal(kx, (batch, seq, hidden), dtype=jnp.float32)

    # nn.Linear-style uniform init (deterministic), stored input-major.
    bound1 = 1.0 / math.sqrt(hidden)
    w1 = jax.random.uniform(kw1, (hidden, ff), jnp.float32, -bound1, bound1)
    b1 = jax.random.uniform(kb1, (ff,), jnp.float32, -bound1, bound1)
    bound2 = 1.0 / math.sqrt(ff)
    w2 = jax.random.uniform(kw2, (ff, hidden), jnp.float32, -bound2, bound2)
    b2 = jax.random.uniform(kb2, (hidden,), jnp.float32, -bound2, bound2)

    # f32 path (accumulates directly in o_ref).
    out = jax.block_until_ready(transformer_mlp(x, w1, b1, w2, b2))
    ref = jax.block_until_ready(_reference(x, w1, b1, w2, b2))
    assert out.shape == (batch, seq, hidden)
    assert jnp.allclose(out, ref, atol=1e-5, rtol=1e-5), "f32 mismatch vs reference"

    # bf16 path (exercises the scratch-accumulator kernel).
    xb, w1b, b1b = x.astype(jnp.bfloat16), w1.astype(jnp.bfloat16), b1.astype(jnp.bfloat16)
    w2b, b2b = w2.astype(jnp.bfloat16), b2.astype(jnp.bfloat16)
    out_b = jax.block_until_ready(transformer_mlp(xb, w1b, b1b, w2b, b2b))
    ref_b = jax.block_until_ready(_reference(xb, w1b, b1b, w2b, b2b))
    assert out_b.shape == (batch, seq, hidden)
    assert jnp.allclose(out_b.astype(jnp.float32), ref_b, atol=2e-2, rtol=2e-2), \
        "bf16 mismatch vs reference"

    print("KERNEL_OK")
</pallas_src>

<mosaic_0001>
module attributes {stable_mosaic.version = 11 : i64} {
  func.func @_mlp_kernel_f32out(%arg0: i32, %arg1: i32, %arg2: memref<8x32xf32, #tpu.memory_space<vmem>>, %arg3: memref<32x64xf32, #tpu.memory_space<vmem>>, %arg4: memref<1x64xf32, #tpu.memory_space<vmem>>, %arg5: memref<64x32xf32, #tpu.memory_space<vmem>>, %arg6: memref<1x32xf32, #tpu.memory_space<vmem>>, %arg7: memref<8x32xf32, #tpu.memory_space<vmem>>) attributes {dimension_semantics = [#tpu.dimension_semantics<parallel>, #tpu.dimension_semantics<arbitrary>], iteration_bounds = array<i64: 2, 1>, scalar_prefetch = 0 : i64, scratch_operands = 0 : i64, tpu.core_type = #tpu.core_type<tc>, window_params = [{transform_indices = @transform_0, window_bounds = array<i64: 8, 32>}, {transform_indices = @transform_1, window_bounds = array<i64: 32, 64>}, {transform_indices = @transform_2, window_bounds = array<i64: 1, 64>}, {transform_indices = @transform_3, window_bounds = array<i64: 64, 32>}, {pipeline_mode = #tpu.pipeline_mode<synchronous>, transform_indices = @transform_4, window_bounds = array<i64: 1, 32>}, {pipeline_mode = #tpu.pipeline_mode<synchronous>, transform_indices = @transform_5, window_bounds = array<i64: 8, 32>}]} {
    %c0 = arith.constant 0 : index
    %c0_0 = arith.constant 0 : index
    %0 = vector.load %arg2[%c0, %c0_0] : memref<8x32xf32, #tpu.memory_space<vmem>>, vector<8x32xf32>
    %c0_1 = arith.constant 0 : index
    %c0_2 = arith.constant 0 : index
    %1 = vector.load %arg3[%c0_1, %c0_2] : memref<32x64xf32, #tpu.memory_space<vmem>>, vector<32x64xf32>
    %cst = arith.constant dense<0.000000e+00> : vector<8x64xf32>
    %2 = tpu.matmul %0, %1, %cst {dimension_numbers = #tpu.dot_dimension_numbers<[1], [0], [0], [1], [0, 0, 1, 1], [], []>} : vector<8x32xf32>, vector<32x64xf32>, vector<8x64xf32> -> vector<8x64xf32>
    %c0_3 = arith.constant 0 : index
    %c0_4 = arith.constant 0 : index
    %3 = vector.load %arg4[%c0_3, %c0_4] : memref<1x64xf32, #tpu.memory_space<vmem>>, vector<1x64xf32>
    %4 = vector.broadcast %3 : vector<1x64xf32> to vector<8x64xf32>
    %5 = arith.addf %2, %4 : vector<8x64xf32>
    %cst_5 = arith.constant 5.000000e-01 : f32
    %6 = vector.broadcast %cst_5 : f32 to vector<8x64xf32>
    %7 = arith.mulf %6, %5 : vector<8x64xf32>
    %cst_6 = arith.constant 0.707106769 : f32
    %8 = vector.broadcast %cst_6 : f32 to vector<8x64xf32>
    %9 = arith.mulf %5, %8 : vector<8x64xf32>
    %10 = math.erf %9 : vector<8x64xf32>
    %cst_7 = arith.constant 1.000000e+00 : f32
    %11 = vector.broadcast %cst_7 : f32 to vector<8x64xf32>
    %12 = arith.addf %11, %10 : vector<8x64xf32>
    %13 = arith.mulf %7, %12 : vector<8x64xf32>
    %c0_8 = arith.constant 0 : index
    %c0_9 = arith.constant 0 : index
    %14 = vector.load %arg5[%c0_8, %c0_9] : memref<64x32xf32, #tpu.memory_space<vmem>>, vector<64x32xf32>
    %cst_10 = arith.constant dense<0.000000e+00> : vector<8x32xf32>
    %15 = tpu.matmul %13, %14, %cst_10 {dimension_numbers = #tpu.dot_dimension_numbers<[1], [0], [0], [1], [0, 0, 1, 1], [], []>} : vector<8x64xf32>, vector<64x32xf32>, vector<8x32xf32> -> vector<8x32xf32>
    %c0_i32 = arith.constant 0 : i32
    %16 = arith.cmpi eq, %arg1, %c0_i32 : i32
    %17 = arith.extui %16 : i1 to i32
    %c0_i32_11 = arith.constant 0 : i32
    %18 = arith.cmpi ne, %17, %c0_i32_11 : i32
    scf.if %18 {
      %c0_14 = arith.constant 0 : index
      %c0_15 = arith.constant 0 : index
      %22 = vector.load %arg6[%c0_14, %c0_15] : memref<1x32xf32, #tpu.memory_space<vmem>>, vector<1x32xf32>
      %23 = vector.broadcast %22 : vector<1x32xf32> to vector<8x32xf32>
      %24 = arith.addf %15, %23 : vector<8x32xf32>
      %c0_16 = arith.constant 0 : index
      %c0_17 = arith.constant 0 : index
      %25 = vector.load %arg7[%c0_16, %c0_17] : memref<8x32xf32, #tpu.memory_space<vmem>>, vector<8x32xf32>
      tpu.vector_store %arg7[%c0_16, %c0_17], %24 {strides = array<i32>} : memref<8x32xf32, #tpu.memory_space<vmem>>, vector<8x32xf32>,
    } else {
    }
    %c0_i32_12 = arith.constant 0 : i32
    %19 = arith.cmpi ne, %arg1, %c0_i32_12 : i32
    %20 = arith.extui %19 : i1 to i32
    %c0_i32_13 = arith.constant 0 : i32
    %21 = arith.cmpi ne, %20, %c0_i32_13 : i32
    scf.if %21 {
      %c0_14 = arith.constant 0 : index
      %c0_15 = arith.constant 0 : index
      %22 = vector.load %arg7[%c0_14, %c0_15] : memref<8x32xf32, #tpu.memory_space<vmem>>, vector<8x32xf32>
      %23 = arith.addf %22, %15 : vector<8x32xf32>
      %c0_16 = arith.constant 0 : index
      %c0_17 = arith.constant 0 : index
      %24 = vector.load %arg7[%c0_16, %c0_17] : memref<8x32xf32, #tpu.memory_space<vmem>>, vector<8x32xf32>
      tpu.vector_store %arg7[%c0_16, %c0_17], %23 {strides = array<i32>} : memref<8x32xf32, #tpu.memory_space<vmem>>, vector<8x32xf32>,
    } else {
    }
    return
  }
  func.func @transform_0(%arg0: i32, %arg1: i32) -> (i32, i32) {
    %c0_i32 = arith.constant 0 : i32
    %c0_i32_0 = arith.constant 0 : i32
    return %arg0, %c0_i32 : i32, i32
  }
  func.func @transform_1(%arg0: i32, %arg1: i32) -> (i32, i32) {
    %c0_i32 = arith.constant 0 : i32
    %c0_i32_0 = arith.constant 0 : i32
    return %c0_i32, %arg1 : i32, i32
  }
  func.func @transform_2(%arg0: i32, %arg1: i32) -> (i32, i32) {
    %c0_i32 = arith.constant 0 : i32
    %c0_i32_0 = arith.constant 0 : i32
    return %c0_i32, %arg1 : i32, i32
  }
  func.func @transform_3(%arg0: i32, %arg1: i32) -> (i32, i32) {
    %c0_i32 = arith.constant 0 : i32
    %c0_i32_0 = arith.constant 0 : i32
    return %arg1, %c0_i32 : i32, i32
  }
  func.func @transform_4(%arg0: i32, %arg1: i32) -> (i32, i32) {
    %c0_i32 = arith.constant 0 : i32
    %c0_i32_0 = arith.constant 0 : i32
    %c0_i32_1 = arith.constant 0 : i32
    return %c0_i32, %c0_i32_0 : i32, i32
  }
  func.func @transform_5(%arg0: i32, %arg1: i32) -> (i32, i32) {
    %c0_i32 = arith.constant 0 : i32
    %c0_i32_0 = arith.constant 0 : i32
    return %arg0, %c0_i32 : i32, i32
  }
}

</mosaic_0001>

<llo_original>
// kernel: tpu_custom_call.1
$region0: #{tpu_custom_call.1}
  #allocation0 [shape = 'u32[]', space=smem, size = 0x4, offset = 0x4, fixed_abs, tag = 'smem constant byte address 0x4 - core index']
  #allocation1 [shape = 'u32[144,128]{1,0:T(1,128)}', space=vmem, size = 0x12000, scoped, tag = 'internal scratch']
  %s0 = inlined_call_operand.vmem [shape: f32[16,32], index: 0, kind: input, shape index: {}]
  %s1 = inlined_call_operand.vmem [shape: f32[32,64], index: 1, kind: input, shape index: {}]
  %s2 = inlined_call_operand.vmem [shape: f32[1,64], index: 2, kind: input, shape index: {}]
  %s3 = inlined_call_operand.vmem [shape: f32[64,32], index: 3, kind: input, shape index: {}]
  %s4 = inlined_call_operand.vmem [shape: f32[1,32], index: 4, kind: input, shape index: {}]
  %s5 = inlined_call_operand.hbm [shape: f32[16,32], index: 5, kind: output, shape index: {}]
  %s6 = sld [smem:[#allocation0]]
  $region61: #{tpu_custom_call.1} parent=0
    _
  %s8 = ssub.s32 1, %s6
  %s9 = scalar_select 0, %s8, %s6
  $region1: #{tpu_custom_call.1} parent=0
    #allocation2 [shape = 'u8[4096]{0}', space=vmem, size = 0x1000, scoped, tag = 'output window, operand 0, single buffered']
    #allocation3 [shape = 's32[2]{0}', space=sflag, size = 0x8, scoped, tag = 'scoped memory for tpu_custom_call.1']
    %10 = vsyncpa [#allocation3], 0
    loop: start=0, step=1, limit=4
    $region2: #{tpu_custom_call.1} parent=1 // loop_pre_header
      _
    $region3: #{tpu_custom_call.1} parent=1 // loop_header
      %s12 = sphi 0, %s16
      %p13 = scmp.ge.s32.totalorder %s12, 4
      %s19 = sphi 0, %s31
      %s20 = sphi 0, %s27
      %s21 = sphi 0, %s19
      %s22 = sphi 0, %s20
      %s23 = sphi 0, %s21
      %s24 = sphi 0, %s22
      %s34 = sphi 0, %s36
      %s37 = sphi 0, %s34
      %s38 = sphi 0, %s37
      %s54 = sphi 0, %s38
      %s60 = sphi 0, %s62
      %s63 = sphi 0, %s60
      %s64 = sphi 0, %s63
      %s80 = sphi 0, %s64
      %s86 = sphi 0, %s88
      %s89 = sphi 0, %s86
      %s90 = sphi 0, %s89
      %s106 = sphi 0, %s90
      %s112 = sphi 0, %s114
      %s115 = sphi 0, %s112
      %s116 = sphi 0, %s115
      %s132 = sphi 0, %s116
      %s136 = sphi 0, %s136
      %s138 = sphi 0, %s136
      %s139 = sphi 0, %s138
      %s153 = sphi 0, %s139
      %s159 = sphi 0, %s161
      %s162 = sphi 0, %s159
      %s163 = sphi 0, %s162
      %s179 = sphi 0, %s163
    $region4: #{tpu_custom_call.1} parent=1 // loop_header_branch
      %15 = sbr.rel (%p13) target = $region8
    $region5: #{tpu_custom_call.1} parent=1 // loop_body
      %s17 = ssub.s32 %s12, 1
      %s18 = ssub.s32 %s12, 2
      %s25 = sadd.s32 1, %s20
      %p26 = scmp.ge.s32.totalorder %s25, 1
      %s27 = scalar_select %p26, 0, %s25
      %s28 = sadd.s32 1, %s19
      %s29 = scalar_select %p26, %s28, %s19
      %p30 = scmp.ge.s32.totalorder %s29, 2
      %s31 = scalar_select %p30, 0, %s29
      %s32 = ssub.s32 %s19, %s31
      %p33 = scmp.eq.s32.totalorder %s32, 0
      %s35 = sadd.s32 %s34, 1
      %s36 = scalar_select %p33, %s34, %s35
      %p39 = pneg %p33
      %p40 = scmp.eq.s32.totalorder %s12, 1
      %p41 = por %p39, %p40
      %p42 = scmp.ne.s32.totalorder %s34, %s37
      %p43 = scmp.eq.s32.totalorder %s12, 0
      %p44 = por %p42, %p43
      %p45 = scmp.ne.s32.totalorder %s34, %s37
      %p46 = scmp.eq.s32.totalorder %s17, 1
      %p47 = por %p45, %p46
      %p48 = scmp.ne.s32.totalorder %s37, %s38
      %p49 = scmp.eq.s32.totalorder %s17, 0
      %p50 = por %p48, %p49
      %p51 = scmp.ne.s32.totalorder %s37, %s38
      %p52 = scmp.eq.s32.totalorder %s18, 1
      %p53 = por %p51, %p52
      %p55 = scmp.ne.s32.totalorder %s38, %s54
      %p56 = scmp.eq.s32.totalorder %s18, 0
      %p57 = por %p55, %p56
      %s58 = ssub.s32 %s20, %s27
      %p59 = scmp.eq.s32.totalorder %s58, 0
      %s61 = sadd.s32 %s60, 1
      %s62 = scalar_select %p59, %s60, %s61
      %p65 = pneg %p59
      %p66 = scmp.eq.s32.totalorder %s12, 1
      %p67 = por %p65, %p66
      %p68 = scmp.ne.s32.totalorder %s60, %s63
      %p69 = scmp.eq.s32.totalorder %s12, 0
      %p70 = por %p68, %p69
      %p71 = scmp.ne.s32.totalorder %s60, %s63
      %p72 = scmp.eq.s32.totalorder %s17, 1
      %p73 = por %p71, %p72
      %p74 = scmp.ne.s32.totalorder %s63, %s64
      %p75 = scmp.eq.s32.totalorder %s17, 0
      %p76 = por %p74, %p75
      %p77 = scmp.ne.s32.totalorder %s63, %s64
      %p78 = scmp.eq.s32.totalorder %s18, 1
      %p79 = por %p77, %p78
      %p81 = scmp.ne.s32.totalorder %s64, %s80
      %p82 = scmp.eq.s32.totalorder %s18, 0
      %p83 = por %p81, %p82
      %s84 = ssub.s32 %s20, %s27
      %p85 = scmp.eq.s32.totalorder %s84, 0
      %s87 = sadd.s32 %s86, 1
      %s88 = scalar_select %p85, %s86, %s87
      %p91 = pneg %p85
      %p92 = scmp.eq.s32.totalorder %s12, 1
      %p93 = por %p91, %p92
      %p94 = scmp.ne.s32.totalorder %s86, %s89
      %p95 = scmp.eq.s32.totalorder %s12, 0
      %p96 = por %p94, %p95
      %p97 = scmp.ne.s32.totalorder %s86, %s89
      %p98 = scmp.eq.s32.totalorder %s17, 1
      %p99 = por %p97, %p98
      %p100 = scmp.ne.s32.totalorder %s89, %s90
      %p101 = scmp.eq.s32.totalorder %s17, 0
      %p102 = por %p100, %p101
      %p103 = scmp.ne.s32.totalorder %s89, %s90
      %p104 = scmp.eq.s32.totalorder %s18, 1
      %p105 = por %p103, %p104
      %p107 = scmp.ne.s32.totalorder %s90, %s106
      %p108 = scmp.eq.s32.totalorder %s18, 0
      %p109 = por %p107, %p108
      %s110 = ssub.s32 %s20, %s27
      %p111 = scmp.eq.s32.totalorder %s110, 0
      %s113 = sadd.s32 %s112, 1
      %s114 = scalar_select %p111, %s112, %s113
      %p117 = pneg %p111
      %p118 = scmp.eq.s32.totalorder %s12, 1
      %p119 = por %p117, %p118
      %p120 = scmp.ne.s32.totalorder %s112, %s115
      %p121 = scmp.eq.s32.totalorder %s12, 0
      %p122 = por %p120, %p121
      %p123 = scmp.ne.s32.totalorder %s112, %s115
      %p124 = scmp.eq.s32.totalorder %s17, 1
      %p125 = por %p123, %p124
      %p126 = scmp.ne.s32.totalorder %s115, %s116
      %p127 = scmp.eq.s32.totalorder %s17, 0
      %p128 = por %p126, %p127
      %p129 = scmp.ne.s32.totalorder %s115, %s116
      %p130 = scmp.eq.s32.totalorder %s18, 1
      %p131 = por %p129, %p130
      %p133 = scmp.ne.s32.totalorder %s116, %s132
      %p134 = scmp.eq.s32.totalorder %s18, 0
      %p135 = por %p133, %p134
      %s137 = sadd.s32 %s136, 1
      %p140 = scmp.eq.s32.totalorder %s12, 1
      %p141 = scmp.ne.s32.totalorder %s136, %s138
      %p142 = scmp.eq.s32.totalorder %s12, 0
      %p143 = por %p141, %p142
      %p144 = scmp.ne.s32.totalorder %s136, %s138
      %p145 = scmp.eq.s32.totalorder %s17, 1
      %p146 = por %p144, %p145
      %p147 = scmp.ne.s32.totalorder %s138, %s139
      %p148 = scmp.eq.s32.totalorder %s17, 0
      %p149 = por %p147, %p148
      %p150 = scmp.ne.s32.totalorder %s138, %s139
      %p151 = scmp.eq.s32.totalorder %s18, 1
      %p152 = por %p150, %p151
      %p154 = scmp.ne.s32.totalorder %s139, %s153
      %p155 = scmp.eq.s32.totalorder %s18, 0
      %p156 = por %p154, %p155
      %s157 = ssub.s32 %s19, %s31
      %p158 = scmp.eq.s32.totalorder %s157, 0
      %s160 = sadd.s32 %s159, 1
      %s161 = scalar_select %p158, %s159, %s160
      %p164 = pneg %p158
      %p165 = scmp.eq.s32.totalorder %s12, 1
      %p166 = por %p164, %p165
      %p167 = scmp.ne.s32.totalorder %s159, %s162
      %p168 = scmp.eq.s32.totalorder %s12, 0
      %p169 = por %p167, %p168
      %p170 = scmp.ne.s32.totalorder %s159, %s162
      %p171 = scmp.eq.s32.totalorder %s17, 1
      %p172 = por %p170, %p171
      %p173 = scmp.ne.s32.totalorder %s162, %s163
      %p174 = scmp.eq.s32.totalorder %s17, 0
      %p175 = por %p173, %p174
      %p176 = scmp.ne.s32.totalorder %s162, %s163
      %p177 = scmp.eq.s32.totalorder %s18, 1
      %p178 = por %p176, %p177
      %p180 = scmp.ne.s32.totalorder %s163, %s179
      %p181 = scmp.eq.s32.totalorder %s18, 0
      %p182 = por %p180, %p181
      %p183 = scmp.le.s32.totalorder 1, %s12
      %p184 = scmp.lt.s32.totalorder %s12, 3
      %p185 = pnand %p183, %p184
      %p186 = pneg %p185
      // Predicated region
      $region9: #{tpu_custom_call.1} parent=5 // pred_check
        _
      $region10: #{tpu_custom_call.1} parent=5 // pred_check_branch
        %188 = sbr.rel (%p185) target = $region12
      $region11: #{tpu_custom_call.1} parent=5 // pred_region
        %s189 = ssub.s32 %s12, 1
        // Predicated region
        $region13: #{tpu_custom_call.1} parent=11 // pred_check
          %p190 = pneg %p76
        $region14: #{tpu_custom_call.1} parent=11 // pred_check_branch
          %192 = sbr.rel (%p190) target = $region16
        $region15: #{tpu_custom_call.1} parent=11 // pred_region
          %p193 = scmp.lt.s32.totalorder %s22, 0
          %s194 = scalar_select %p193, %s22, 0
          %s195 = smul.addr %s194, 8
          %s196 = scalar_lea.vmem %s1, %s195
        $region16: #{tpu_custom_call.1} parent=11 // pred_fallthru
          _
        // Predicated region
        $region17: #{tpu_custom_call.1} parent=11 // pred_check
          %p197 = pneg %p102
        $region18: #{tpu_custom_call.1} parent=11 // pred_check_branch
          %199 = sbr.rel (%p197) target = $region20
        $region19: #{tpu_custom_call.1} parent=11 // pred_region
          %p200 = scmp.lt.s32.totalorder %s22, 0
          %s201 = scalar_select %p200, %s22, 0
          %s202 = scalar_lea.vmem %s2, %s201
        $region20: #{tpu_custom_call.1} parent=11 // pred_fallthru
          _
        // Predicated region
        $region21: #{tpu_custom_call.1} parent=11 // pred_check
          %p203 = pneg %p128
        $region22: #{tpu_custom_call.1} parent=11 // pred_check_branch
          %205 = sbr.rel (%p203) target = $region24
        $region23: #{tpu_custom_call.1} parent=11 // pred_region
          %s206 = smul.u32 8, %s22
          %p207 = scmp.lt.s32.totalorder %s206, 7
          %s208 = scalar_select %p207, %s206, 7
          %s209 = smul.addr %s208, 8
          %s210 = scalar_lea.vmem %s3, %s209
          %s211 = smul.u32 8, %s22
        $region24: #{tpu_custom_call.1} parent=11 // pred_fallthru
          _
        // Predicated region
        $region25: #{tpu_custom_call.1} parent=11 // pred_check
          %p212 = pneg %p149
        $region26: #{tpu_custom_call.1} parent=11 // pred_check_branch
          %214 = sbr.rel (%p212) target = $region28
        $region27: #{tpu_custom_call.1} parent=11 // pred_region
          _
        $region28: #{tpu_custom_call.1} parent=11 // pred_fallthru
          _
      $region12: #{tpu_custom_call.1} parent=5 // pred_fallthru
        _
      %p215 = scmp.lt.s32.totalorder %s12, 2
      // Predicated region
      $region29: #{tpu_custom_call.1} parent=5 // pred_check
        %p216 = pneg %p215
      $region30: #{tpu_custom_call.1} parent=5 // pred_check_branch
        %218 = sbr.rel (%p216) target = $region32
      $region31: #{tpu_custom_call.1} parent=5 // pred_region
        // Predicated region
        $region33: #{tpu_custom_call.1} parent=31 // pred_check
          %p219 = pneg %p44
        $region34: #{tpu_custom_call.1} parent=31 // pred_check_branch
          %221 = sbr.rel (%p219) target = $region36
        $region35: #{tpu_custom_call.1} parent=31 // pred_region
          %p222 = scmp.lt.s32.totalorder %s19, 1
          %s223 = scalar_select %p222, %s19, 1
          %s224 = smul.addr %s223, 8
          %s225 = scalar_lea.vmem %s0, %s224
        $region36: #{tpu_custom_call.1} parent=31 // pred_fallthru
          _
      $region32: #{tpu_custom_call.1} parent=5 // pred_fallthru
        _
      %p226 = scmp.le.s32.totalorder 1, %s12
      %p227 = scmp.lt.s32.totalorder %s12, 3
      %p228 = pnand %p226, %p227
      %p229 = pneg %p228
      // Predicated region
      $region37: #{tpu_custom_call.1} parent=5 // pred_check
        _
      $region38: #{tpu_custom_call.1} parent=5 // pred_check_branch
        %231 = sbr.rel (%p228) target = $region40
      $region39: #{tpu_custom_call.1} parent=5 // pred_region
        %s232 = ssub.s32 %s12, 1
        %p233 = scmp.lt.s32.totalorder %s21, 1
        %s234 = scalar_select %p233, %s21, 1
        %s235 = smul.addr %s234, 8
        %s236 = scalar_lea.vmem %s0, %s235
        %p237 = pneg %p50
        %p238 = pneg %p47
        %p239 = scmp.lt.s32.totalorder %s22, 0
        %s240 = scalar_select %p239, %s22, 0
        %s241 = smul.addr %s240, 8
        %s242 = scalar_lea.vmem %s1, %s241
        %p243 = pneg %p76
        %p244 = pneg %p73
        %p245 = scmp.lt.s32.totalorder %s22, 0
        %s246 = scalar_select %p245, %s22, 0
        %s247 = scalar_lea.vmem %s2, %s246
        %p248 = pneg %p102
        %p249 = pneg %p99
        %s250 = smul.u32 8, %s22
        %p251 = scmp.lt.s32.totalorder %s250, 7
        %s252 = scalar_select %p251, %s250, 7
        %s253 = smul.addr %s252, 8
        %s254 = scalar_lea.vmem %s3, %s253
        %p255 = pneg %p128
        %p256 = pneg %p125
        %p257 = pneg %p149
        %p258 = pneg %p146
        %p259 = pneg %p175
        %p260 = pneg %p172
        %p261 = scmp.lt.s32.totalorder %s21, 1
        %s262 = scalar_select %p261, %s21, 1
        %s263 = smul.addr %s262, 8
        %s264 = scalar_lea.vmem %s0, %s263
        %p265 = scmp.lt.s32.totalorder %s22, 0
        %s266 = scalar_select %p265, %s22, 0
        %s267 = smul.addr %s266, 8
        %s268 = scalar_lea.vmem %s1, %s267
        %p269 = scmp.lt.s32.totalorder %s22, 0
        %s270 = scalar_select %p269, %s22, 0
        %s271 = scalar_lea.vmem %s2, %s270
        %s272 = smul.u32 8, %s22
        %p273 = scmp.lt.s32.totalorder %s272, 7
        %s274 = scalar_select %p273, %s272, 7
        %s275 = smul.addr %s274, 8
        %s276 = scalar_lea.vmem %s3, %s275
        %s277 = smul.u32 8, %s22
        %v278 = vld [vmem:[%s264] sm:$0xff]
        %v279 = vld [vmem:[%s268] sm:$0xff]
        %v280 = vld [vmem:[%s268 + $0x8] sm:$0xff]
        %v281 = vld [vmem:[%s268 + $0x10] sm:$0xff]
        %v282 = vld [vmem:[%s268 + $0x18] sm:$0xff]
        %v283 = vld [vmem:[%s271] sm:$0x1]
        %v285 = vlaneseq
        %v286 = vshrl.u32 %v285, 7
        %v287 = vsub.s32 0, %v286
        %v288 = vrot.slane %v283, %v287
        %vm290 = vcmask 261120
        %v292 = vsel %vm290, %v278, 0
        %294 = vmatprep.subr.mxu0 0.0
        %295 = vmatpush1.msra.mxu0 0.0
        %296 = vmatprep.subr.mxu0 0.0
        %297 = vmatpush1.msra.mxu0 0.0
        %298 = vmatprep.subr.mxu0 0.0
        %299 = vmatpush1.msra.mxu0 0.0
        %300 = vmatprep.subr.mxu0 0.0
        %301 = vmatpush1.msra.mxu0 0.0
        %302 = vmatprep.subr.mxu0 0.0
        %303 = vmatpush1.msra.mxu0 0.0
        %304 = vmatprep.subr.mxu0 0.0
        %305 = vmatpush1.msra.mxu0 0.0
        %306 = vmatprep.subr.mxu0 0.0
        %307 = vmatpush1.msra.mxu0 0.0
        %308 = vmatprep.subr.mxu0 0.0
        %309 = vmatpush1.msra.mxu0 0.0
        %310 = vmatprep.subr.mxu0 0.0
        %311 = vmatpush1.msra.mxu0 0.0
        %312 = vmatprep.subr.mxu0 0.0
        %313 = vmatpush1.msra.mxu0 0.0
        %314 = vmatprep.subr.mxu0 0.0
        %315 = vmatpush1.msra.mxu0 0.0
        %316 = vmatprep.subr.mxu0 0.0
        %317 = vmatpush1.msra.mxu0 0.0
        %318 = vmatprep.subr.mxu0 0.0
        %319 = vmatpush1.msra.mxu0 %v282
        %320 = vmatprep.subr.mxu0 0.0
        %321 = vmatpush1.msra.mxu0 %v281
        %322 = vmatprep.subr.mxu0 0.0
        %323 = vmatpush1.msra.mxu0 %v280
        %324 = vmatprep.subr.mxu0 0.0
        %325 = vmatpush1.msra.mxu0 %v279
        %326 = vmatprep.subr.mxu0 0.0
        %327 = vmatpush2.msra.mxu0 0.0
        %328 = vmatprep.subr.mxu0 0.0
        %329 = vmatpush2.msra.mxu0 0.0
        %330 = vmatprep.subr.mxu0 0.0
        %331 = vmatpush2.msra.mxu0 0.0
        %332 = vmatprep.subr.mxu0 0.0
        %333 = vmatpush2.msra.mxu0 0.0
        %334 = vmatprep.subr.mxu0 0.0
        %335 = vmatpush2.msra.mxu0 0.0
        %336 = vmatprep.subr.mxu0 0.0
        %337 = vmatpush2.msra.mxu0 0.0
        %338 = vmatprep.subr.mxu0 0.0
        %339 = vmatpush2.msra.mxu0 0.0
        %340 = vmatprep.subr.mxu0 0.0
        %341 = vmatpush2.msra.mxu0 0.0
        %342 = vmatprep.subr.mxu0 0.0
        %343 = vmatpush2.msra.mxu0 0.0
        %344 = vmatprep.subr.mxu0 0.0
        %345 = vmatpush2.msra.mxu0 0.0
        %346 = vmatprep.subr.mxu0 0.0
        %347 = vmatpush2.msra.mxu0 0.0
        %348 = vmatprep.subr.mxu0 0.0
        %349 = vmatpush2.msra.mxu0 0.0
        %350 = vmatprep.subr.mxu0 0.0
        %351 = vmatpush2.msra.mxu0 0.0
        %352 = vmatprep.subr.mxu0 0.0
        %353 = vmatpush2.msra.mxu0 0.0
        %354 = vmatprep.subr.mxu0 0.0
        %355 = vmatpush2.msra.mxu0 0.0
        %356 = vmatprep.subr.mxu0 0.0
        %357 = vmatpush2.msra.mxu0 0.0
        %358 = vmatprep.mubr.f32.mxu0 0.0
        %359 = vmatmul.mubr.f32.gmra.mxu0 %v292
        %v360 = vpop.f32.mrf.mxu0
        %v361 = vadd.f32 %v288, %v360
        %v362 = vpop.f32.mrf.mxu0
        %363 = vdwg.mxu0
        %v364 = vmul.f32 %v361, 0.5
        %v365 = vmul.f32 %v361, 0.70710677
        %v366 = verf.f32.pop %v365
        %v367 = vadd.f32 %v366, 1.0
        %v368 = vmul.f32 %v364, %v367
        %v369 = vld [vmem:[%s276] sm:$0xff]
        %v370 = vld [vmem:[%s276 + $0x8] sm:$0xff]
        %v371 = vld [vmem:[%s276 + $0x10] sm:$0xff]
        %v372 = vld [vmem:[%s276 + $0x18] sm:$0xff]
        %v373 = vld [vmem:[%s276 + $0x20] sm:$0xff]
        %v374 = vld [vmem:[%s276 + $0x28] sm:$0xff]
        %v375 = vld [vmem:[%s276 + $0x30] sm:$0xff]
        %v376 = vld [vmem:[%s276 + $0x38] sm:$0xff]
        %vm377 = vcmask 523264
        %v379 = vsel %vm377, %v368, 0
        %381 = vmatprep.subr.mxu0 0.0
        %382 = vmatpush1.msra.mxu0 0.0
        %383 = vmatprep.subr.mxu0 0.0
        %384 = vmatpush1.msra.mxu0 0.0
        %385 = vmatprep.subr.mxu0 0.0
        %386 = vmatpush1.msra.mxu0 0.0
        %387 = vmatprep.subr.mxu0 0.0
        %388 = vmatpush1.msra.mxu0 0.0
        %389 = vmatprep.subr.mxu0 0.0
        %390 = vmatpush1.msra.mxu0 0.0
        %391 = vmatprep.subr.mxu0 0.0
        %392 = vmatpush1.msra.mxu0 0.0
        %393 = vmatprep.subr.mxu0 0.0
        %394 = vmatpush1.msra.mxu0 0.0
        %395 = vmatprep.subr.mxu0 0.0
        %396 = vmatpush1.msra.mxu0 0.0
        %397 = vmatprep.subr.mxu0 0.0
        %398 = vmatpush1.msra.mxu0 %v376
        %399 = vmatprep.subr.mxu0 0.0
        %400 = vmatpush1.msra.mxu0 %v375
        %401 = vmatprep.subr.mxu0 0.0
        %402 = vmatpush1.msra.mxu0 %v374
        %403 = vmatprep.subr.mxu0 0.0
        %404 = vmatpush1.msra.mxu0 %v373
        %405 = vmatprep.subr.mxu0 0.0
        %406 = vmatpush1.msra.mxu0 %v372
        %407 = vmatprep.subr.mxu0 0.0
        %408 = vmatpush1.msra.mxu0 %v371
        %409 = vmatprep.subr.mxu0 0.0
        %410 = vmatpush1.msra.mxu0 %v370
        %411 = vmatprep.subr.mxu0 0.0
        %412 = vmatpush1.msra.mxu0 %v369
        %413 = vmatprep.subr.mxu0 0.0
        %414 = vmatpush2.msra.mxu0 0.0
        %415 = vmatprep.subr.mxu0 0.0
        %416 = vmatpush2.msra.mxu0 0.0
        %417 = vmatprep.subr.mxu0 0.0
        %418 = vmatpush2.msra.mxu0 0.0
        %419 = vmatprep.subr.mxu0 0.0
        %420 = vmatpush2.msra.mxu0 0.0
        %421 = vmatprep.subr.mxu0 0.0
        %422 = vmatpush2.msra.mxu0 0.0
        %423 = vmatprep.subr.mxu0 0.0
        %424 = vmatpush2.msra.mxu0 0.0
        %425 = vmatprep.subr.mxu0 0.0
        %426 = vmatpush2.msra.mxu0 0.0
        %427 = vmatprep.subr.mxu0 0.0
        %428 = vmatpush2.msra.mxu0 0.0
        %429 = vmatprep.subr.mxu0 0.0
        %430 = vmatpush2.msra.mxu0 0.0
        %431 = vmatprep.subr.mxu0 0.0
        %432 = vmatpush2.msra.mxu0 0.0
        %433 = vmatprep.subr.mxu0 0.0
        %434 = vmatpush2.msra.mxu0 0.0
        %435 = vmatprep.subr.mxu0 0.0
        %436 = vmatpush2.msra.mxu0 0.0
        %437 = vmatprep.subr.mxu0 0.0
        %438 = vmatpush2.msra.mxu0 0.0
        %439 = vmatprep.subr.mxu0 0.0
        %440 = vmatpush2.msra.mxu0 0.0
        %441 = vmatprep.subr.mxu0 0.0
        %442 = vmatpush2.msra.mxu0 0.0
        %443 = vmatprep.subr.mxu0 0.0
        %444 = vmatpush2.msra.mxu0 0.0
        %445 = vmatprep.mubr.f32.mxu0 0.0
        %446 = vmatmul.mubr.f32.gmra.mxu0 %v379
        %v447 = vpop.f32.mrf.mxu0
        %v448 = vadd.f32 0.0, %v447
        %v449 = vpop.f32.mrf.mxu0
        %450 = vdwg.mxu0
        %p451 = scmp.eq.s32.totalorder %s22, 0
        // Predicated region
        $region41: #{tpu_custom_call.1} parent=39 // pred_check
          %p452 = pneg %p451
        $region42: #{tpu_custom_call.1} parent=39 // pred_check_branch
          %454 = sbr.rel (%p452) target = $region44
        $region43: #{tpu_custom_call.1} parent=39 // pred_region
          %v455 = vld [vmem:[%s4] sm:$0x1]
          %v457 = vlaneseq
          %v458 = vshrl.u32 %v457, 7
          %v459 = vsub.s32 0, %v458
          %v460 = vrot.slane %v455, %v459
          %v462 = vadd.f32 %v448, %v460
          %463 = vst.msk [vmem:[#allocation2] sm:$0xff] %vm290, %v462
        $region44: #{tpu_custom_call.1} parent=39 // pred_fallthru
          _
        %p464 = scmp.ne.s32.totalorder %s22, 0
        // Predicated region
        $region45: #{tpu_custom_call.1} parent=39 // pred_check
          %p465 = pneg %p464
        $region46: #{tpu_custom_call.1} parent=39 // pred_check_branch
          %467 = sbr.rel (%p465) target = $region48
        $region47: #{tpu_custom_call.1} parent=39 // pred_region
          %v468 = vld [vmem:[#allocation2] sm:$0xff]
          %v469 = vadd.f32 %v468, %v448
          %470 = vst.msk [vmem:[#allocation2] sm:$0xff] %vm290, %v469
        $region48: #{tpu_custom_call.1} parent=39 // pred_fallthru
          _
        // Predicated region
        $region49: #{tpu_custom_call.1} parent=39 // pred_check
          %p471 = pneg %p172
        $region50: #{tpu_custom_call.1} parent=39 // pred_check_branch
          %473 = sbr.rel (%p471) target = $region52
        $region51: #{tpu_custom_call.1} parent=39 // pred_region
          %s475 = ssub.s32 128, 128
          %476 = vsyncadd [#allocation3], %s475
          %s477 = smul.addr %s21, 128
          %s478 = scalar_lea.hbm %s5, %s477
          %s480 = sshll.u32 [#allocation2], 4
          %s481 = int_to_ptr.vmem [resolvable:$true] %s480
          %483 = dma.vmem_to_hbm [thread:$0]  %s481, 128, %s478, [#allocation3]
        $region52: #{tpu_custom_call.1} parent=39 // pred_fallthru
          _
        // Predicated region
        $region53: #{tpu_custom_call.1} parent=39 // pred_check
          %p484 = pneg %p172
        $region54: #{tpu_custom_call.1} parent=39 // pred_check_branch
          %486 = sbr.rel (%p484) target = $region56
        $region55: #{tpu_custom_call.1} parent=39 // pred_region
          %487 = dma.done [#allocation3], 128
        $region56: #{tpu_custom_call.1} parent=39 // pred_fallthru
          _
      $region40: #{tpu_custom_call.1} parent=5 // pred_fallthru
        _
      %p488 = scmp.le.s32.totalorder 2, %s12
      // Predicated region
      $region57: #{tpu_custom_call.1} parent=5 // pred_check
        %p489 = pneg %p488
      $region58: #{tpu_custom_call.1} parent=5 // pred_check_branch
        %491 = sbr.rel (%p489) target = $region60
      $region59: #{tpu_custom_call.1} parent=5 // pred_region
        %s492 = ssub.s32 %s12, 2
      $region60: #{tpu_custom_call.1} parent=5 // pred_fallthru
        _
    $region6: #{tpu_custom_call.1} parent=1 // loop_footer
      %s16 = sadd.s32 1, %s12
    $region7: #{tpu_custom_call.1} parent=1 // loop_footer_branch
      %11 = sbr.rel target = $region3
    $region8: #{tpu_custom_call.1} parent=1 // loop_exit
      _
    %493 = vsyncpa [#allocation3], 1
    %s494 = scalar_lea.sflag [#allocation3], 1
    %495 = vsyncpa %s494, 1

</llo_original>
